<compile_context>
chip_gen: v6e
topology: v6e:2x2x1
jax: 0.10.0
libtpu: 0.0.40
codegen_flags: <defaults>
</compile_context>

<pallas_src>
import functools
import math

import jax
import jax.numpy as jnp
from jax.experimental import pallas as pl
from jax.experimental.pallas import tpu as pltpu

LANE = 128     # vreg lane width: hidden feature dims padded to multiples of this
SUBLANE = 8    # sublane height: batch-tile rows aligned to multiples of this
_TM_MAX = 1024  # max batch-tile rows (amortizes ~0.35us per-grid-step overhead)


def _round_up(x, m):
    return (x + m - 1) // m * m


def _pick_tm(m):
    """Batch-tile rows: big tiles, but >=2 tiles when possible (v7x megacore)."""
    if m <= 2 * SUBLANE:
        return m                                   # one block; dims == array dims
    return min(_round_up(pl.cdiv(m, 2), 2 * SUBLANE), _TM_MAX)


def _fused_mlp_kernel(x_ref, *refs):
    """Whole MLP for one batch tile, fully fused.

    refs = (w0, b0, w1, b1, ..., wL, bL, o_ref)
      x_ref : (tm, ninp)   bf16  batch tile of inputs (natural feature width)
      wi    : (Kip, Nip)   bf16  VMEM-resident weights (hidden dims 128-padded)
      bi    : (1,  Nip)    f32   biases
      o_ref : (tm, nout)   f32   batch tile of outputs (natural width)
    Hidden layers: Linear -> ReLU.  Last layer: Linear only.
    Intermediate activations never touch HBM; carried in bf16 between layers.
    """
    o_ref = refs[-1]
    wb = refs[:-1]
    n_layers = len(wb) // 2

    acts = x_ref[...]                              # bf16 (tm, K)
    for li in range(n_layers):                     # static unroll over layers
        w = wb[2 * li][...]                        # bf16 (Kp, Np)
        b = wb[2 * li + 1][...]                    # f32  (1, Np)
        acc = jnp.dot(acts, w, preferred_element_type=jnp.float32)   # MXU, f32 acc
        acc = acc + b                              # f32 bias epilogue
        if li < n_layers - 1:
            acc = jnp.maximum(acc, 0.0)            # ReLU on hidden layers
            acts = acc.astype(jnp.bfloat16)        # carry bf16 between layers
        else:
            o_ref[...] = acc.astype(o_ref.dtype)   # final layer: no ReLU


def init_fully_connected_params(key, ninp, nhid, nout, nlayers):
    """Deterministic init matching FullyConnectedNN.__init__/reset_parameters.

    Weights: xavier normal (std = sqrt(2 / (fan_in + fan_out))).
    Biases:  PyTorch Linear default, U(-1/sqrt(fan_in), 1/sqrt(fan_in)).
    Weights stored transposed as [in, out] so the kernel computes x @ W + b.
    """
    if nlayers > 1:
        dims = [(ninp, nhid)] + [(nhid, nhid)] * (nlayers - 2) + [(nhid, nout)]
    else:
        dims = [(ninp, nout)]

    params = []
    for fan_in, fan_out in dims:
        key, wk, bk = jax.random.split(key, 3)
        std = math.sqrt(2.0 / (fan_in + fan_out))
        w = std * jax.random.normal(wk, (fan_in, fan_out), dtype=jnp.float32)
        bound = 1.0 / math.sqrt(fan_in)
        b = jax.random.uniform(
            bk, (fan_out,), dtype=jnp.float32, minval=-bound, maxval=bound)
        params.append((w, b))
    return params


def pack_params_for_kernel(params, lane_pad=LANE, weight_dtype=jnp.bfloat16):
    """Zero-pad HIDDEN feature dims to multiples of 128 and cast weights to bf16.

    The first layer's K dim (ninp) and the last layer's N dim (nout) stay at
    natural width so the kernel consumes x and produces the output directly
    (no host pad of x, no post-kernel slice).  Padding is zero => exact.
    """
    n = len(params)
    ws, bs = [], []
    for i, (w, b) in enumerate(params):
        kin, kout = w.shape
        kin_p = kin if i == 0 else _round_up(kin, lane_pad)
        kout_p = kout if i == n - 1 else _round_up(kout, lane_pad)
        wp = jnp.zeros((kin_p, kout_p), weight_dtype)
        wp = wp.at[:kin, :kout].set(w.astype(weight_dtype))
        bp = jnp.zeros((1, kout_p), jnp.float32).at[:, :kout].set(b)
        ws.append(wp)
        bs.append(bp)
    return tuple(ws), tuple(bs)


def fully_connected_forward(packed_ws, packed_bs, x):
    """Forward pass of FullyConnectedNN (eval mode) in one fused Pallas call.

    x: (M, ninp) f32 or bf16.  Returns (M, nout) f32.
    """
    # TODO(synk): dropout is a no-op in eval mode; training-mode dropout
    # (pltpu.prng_random_bits masking) is not implemented here.
    M, ninp = x.shape
    assert ninp == packed_ws[0].shape[0]
    nout = packed_ws[-1].shape[1]

    # Feed the MXU-native dtype straight from HBM (halves input read traffic;
    # numerically identical to casting inside the kernel).
    if x.dtype != jnp.bfloat16:
        x = x.astype(jnp.bfloat16)

    tm = _pick_tm(M)
    grid = (pl.cdiv(M, tm),)   # ragged last tile handled by Pallas; no host pad

    in_specs = [pl.BlockSpec((tm, ninp), lambda i: (i, 0))]
    operands = [x]
    flops = 0
    bytes_accessed = x.size * x.dtype.itemsize + M * nout * 4
    for w, b in zip(packed_ws, packed_bs):
        kin, kout = w.shape
        # Grid-invariant index_map: tiny weights/biases are DMA'd once and stay
        # VMEM-resident across all batch tiles.
        in_specs.append(pl.BlockSpec((kin, kout), lambda i: (0, 0)))
        in_specs.append(pl.BlockSpec((1, kout), lambda i: (0, 0)))
        operands += [w, b]
        flops += 2 * M * kin * kout
        bytes_accessed += w.size * w.dtype.itemsize + b.size * 4

    return pl.pallas_call(
        _fused_mlp_kernel,
        out_shape=jax.ShapeDtypeStruct((M, nout), jnp.float32),
        grid=grid,
        in_specs=in_specs,
        out_specs=pl.BlockSpec((tm, nout), lambda i: (i, 0)),
        compiler_params=pltpu.CompilerParams(
            # Batch tiles are independent -> shard across TCs on v7x megacore.
            dimension_semantics=("parallel",),
        ),
        cost_estimate=pl.CostEstimate(
            flops=flops, transcendentals=0, bytes_accessed=bytes_accessed),
    )(*operands)


if __name__ == "__main__":
    # Small shapes implied by the module: flat feature vectors per example.
    batch, ninp, nhid, nout, nlayers = 8, 32, 64, 16, 3
    dropout = 0.0  # dropout > 0 would still be identity in eval mode

    key = jax.random.PRNGKey(0)
    key, pkey, xkey = jax.random.split(key, 3)
    params = init_fully_connected_params(pkey, ninp, nhid, nout, nlayers)
    packed_ws, packed_bs = pack_params_for_kernel(params)
    x = jax.random.normal(xkey, (batch, ninp), dtype=jnp.float32)

    fwd = jax.jit(fully_connected_forward)
    out = jax.block_until_ready(fwd(packed_ws, packed_bs, x))
    assert out.shape == (batch, nout), out.shape

    # Pure-JAX reference mirroring the kernel's quantization points exactly
    # (bf16 input / weights / inter-layer activations, f32 accumulate + bias
    # + ReLU), so the tolerance can be tight and real regressions show up.
    ref = x.astype(jnp.bfloat16).astype(jnp.float32)
    for i, (w, b) in enumerate(params):
        wq = w.astype(jnp.bfloat16).astype(jnp.float32)
        ref = ref @ wq + b
        if i < len(params) - 1:
            ref = jnp.maximum(ref, 0.0)
            ref = ref.astype(jnp.bfloat16).astype(jnp.float32)
    err = float(jnp.max(jnp.abs(out - ref)))
    assert jnp.allclose(out, ref, atol=2e-3, rtol=2e-3), err

    print("KERNEL_OK")
</pallas_src>

<mosaic_0001>
module attributes {stable_mosaic.version = 11 : i64} {
  func.func @_fused_mlp_kernel(%arg0: i32, %arg1: memref<8x32xbf16, #tpu.memory_space<vmem>>, %arg2: memref<32x128xbf16, #tpu.memory_space<vmem>>, %arg3: memref<1x128xf32, #tpu.memory_space<vmem>>, %arg4: memref<128x128xbf16, #tpu.memory_space<vmem>>, %arg5: memref<1x128xf32, #tpu.memory_space<vmem>>, %arg6: memref<128x16xbf16, #tpu.memory_space<vmem>>, %arg7: memref<1x16xf32, #tpu.memory_space<vmem>>, %arg8: memref<8x16xf32, #tpu.memory_space<vmem>>) attributes {dimension_semantics = [#tpu.dimension_semantics<parallel>], iteration_bounds = array<i64: 1>, scalar_prefetch = 0 : i64, scratch_operands = 0 : i64, tpu.core_type = #tpu.core_type<tc>, window_params = [{transform_indices = @transform_0, window_bounds = array<i64: 8, 32>}, {pipeline_mode = #tpu.pipeline_mode<synchronous>, transform_indices = @transform_1, window_bounds = array<i64: 32, 128>}, {pipeline_mode = #tpu.pipeline_mode<synchronous>, transform_indices = @transform_2, window_bounds = array<i64: 1, 128>}, {pipeline_mode = #tpu.pipeline_mode<synchronous>, transform_indices = @transform_3, window_bounds = array<i64: 128, 128>}, {pipeline_mode = #tpu.pipeline_mode<synchronous>, transform_indices = @transform_4, window_bounds = array<i64: 1, 128>}, {pipeline_mode = #tpu.pipeline_mode<synchronous>, transform_indices = @transform_5, window_bounds = array<i64: 128, 16>}, {pipeline_mode = #tpu.pipeline_mode<synchronous>, transform_indices = @transform_6, window_bounds = array<i64: 1, 16>}, {transform_indices = @transform_7, window_bounds = array<i64: 8, 16>}]} {
    %c0 = arith.constant 0 : index
    %c0_0 = arith.constant 0 : index
    %0 = vector.load %arg1[%c0, %c0_0] : memref<8x32xbf16, #tpu.memory_space<vmem>>, vector<8x32xbf16>
    %c0_1 = arith.constant 0 : index
    %c0_2 = arith.constant 0 : index
    %1 = vector.load %arg2[%c0_1, %c0_2] : memref<32x128xbf16, #tpu.memory_space<vmem>>, vector<32x128xbf16>
    %c0_3 = arith.constant 0 : index
    %c0_4 = arith.constant 0 : index
    %2 = vector.load %arg3[%c0_3, %c0_4] : memref<1x128xf32, #tpu.memory_space<vmem>>, vector<1x128xf32>
    %cst = arith.constant dense<0.000000e+00> : vector<8x128xf32>
    %3 = tpu.matmul %0, %1, %cst {dimension_numbers = #tpu.dot_dimension_numbers<[1], [0], [0], [1], [0, 0, 1, 1], [], []>} : vector<8x32xbf16>, vector<32x128xbf16>, vector<8x128xf32> -> vector<8x128xf32>
    %4 = vector.broadcast %2 : vector<1x128xf32> to vector<8x128xf32>
    %5 = arith.addf %3, %4 : vector<8x128xf32>
    %cst_5 = arith.constant 0.000000e+00 : f32
    %6 = vector.broadcast %cst_5 : f32 to vector<8x128xf32>
    %7 = arith.maximumf %5, %6 : vector<8x128xf32>
    %8 = arith.truncf %7 : vector<8x128xf32> to vector<8x128xbf16>
    %c0_6 = arith.constant 0 : index
    %c0_7 = arith.constant 0 : index
    %9 = vector.load %arg4[%c0_6, %c0_7] : memref<128x128xbf16, #tpu.memory_space<vmem>>, vector<128x128xbf16>
    %c0_8 = arith.constant 0 : index
    %c0_9 = arith.constant 0 : index
    %10 = vector.load %arg5[%c0_8, %c0_9] : memref<1x128xf32, #tpu.memory_space<vmem>>, vector<1x128xf32>
    %cst_10 = arith.constant dense<0.000000e+00> : vector<8x128xf32>
    %11 = tpu.matmul %8, %9, %cst_10 {dimension_numbers = #tpu.dot_dimension_numbers<[1], [0], [0], [1], [0, 0, 1, 1], [], []>} : vector<8x128xbf16>, vector<128x128xbf16>, vector<8x128xf32> -> vector<8x128xf32>
    %12 = vector.broadcast %10 : vector<1x128xf32> to vector<8x128xf32>
    %13 = arith.addf %11, %12 : vector<8x128xf32>
    %cst_11 = arith.constant 0.000000e+00 : f32
    %14 = vector.broadcast %cst_11 : f32 to vector<8x128xf32>
    %15 = arith.maximumf %13, %14 : vector<8x128xf32>
    %16 = arith.truncf %15 : vector<8x128xf32> to vector<8x128xbf16>
    %c0_12 = arith.constant 0 : index
    %c0_13 = arith.constant 0 : index
    %17 = vector.load %arg6[%c0_12, %c0_13] : memref<128x16xbf16, #tpu.memory_space<vmem>>, vector<128x16xbf16>
    %c0_14 = arith.constant 0 : index
    %c0_15 = arith.constant 0 : index
    %18 = vector.load %arg7[%c0_14, %c0_15] : memref<1x16xf32, #tpu.memory_space<vmem>>, vector<1x16xf32>
    %cst_16 = arith.constant dense<0.000000e+00> : vector<8x16xf32>
    %19 = tpu.matmul %16, %17, %cst_16 {dimension_numbers = #tpu.dot_dimension_numbers<[1], [0], [0], [1], [0, 0, 1, 1], [], []>} : vector<8x128xbf16>, vector<128x16xbf16>, vector<8x16xf32> -> vector<8x16xf32>
    %20 = vector.broadcast %18 : vector<1x16xf32> to vector<8x16xf32>
    %21 = arith.addf %19, %20 : vector<8x16xf32>
    %c0_17 = arith.constant 0 : index
    %c0_18 = arith.constant 0 : index
    %22 = vector.load %arg8[%c0_17, %c0_18] : memref<8x16xf32, #tpu.memory_space<vmem>>, vector<8x16xf32>
    tpu.vector_store %arg8[%c0_17, %c0_18], %21 {strides = array<i32>} : memref<8x16xf32, #tpu.memory_space<vmem>>, vector<8x16xf32>,
    return
  }
  func.func @transform_0(%arg0: i32) -> (i32, i32) {
    %c0_i32 = arith.constant 0 : i32
    %c0_i32_0 = arith.constant 0 : i32
    return %arg0, %c0_i32 : i32, i32
  }
  func.func @transform_1(%arg0: i32) -> (i32, i32) {
    %c0_i32 = arith.constant 0 : i32
    %c0_i32_0 = arith.constant 0 : i32
    %c0_i32_1 = arith.constant 0 : i32
    return %c0_i32, %c0_i32_0 : i32, i32
  }
  func.func @transform_2(%arg0: i32) -> (i32, i32) {
    %c0_i32 = arith.constant 0 : i32
    %c0_i32_0 = arith.constant 0 : i32
    %c0_i32_1 = arith.constant 0 : i32
    return %c0_i32, %c0_i32_0 : i32, i32
  }
  func.func @transform_3(%arg0: i32) -> (i32, i32) {
    %c0_i32 = arith.constant 0 : i32
    %c0_i32_0 = arith.constant 0 : i32
    %c0_i32_1 = arith.constant 0 : i32
    return %c0_i32, %c0_i32_0 : i32, i32
  }
  func.func @transform_4(%arg0: i32) -> (i32, i32) {
    %c0_i32 = arith.constant 0 : i32
    %c0_i32_0 = arith.constant 0 : i32
    %c0_i32_1 = arith.constant 0 : i32
    return %c0_i32, %c0_i32_0 : i32, i32
  }
  func.func @transform_5(%arg0: i32) -> (i32, i32) {
    %c0_i32 = arith.constant 0 : i32
    %c0_i32_0 = arith.constant 0 : i32
    %c0_i32_1 = arith.constant 0 : i32
    return %c0_i32, %c0_i32_0 : i32, i32
  }
  func.func @transform_6(%arg0: i32) -> (i32, i32) {
    %c0_i32 = arith.constant 0 : i32
    %c0_i32_0 = arith.constant 0 : i32
    %c0_i32_1 = arith.constant 0 : i32
    return %c0_i32, %c0_i32_0 : i32, i32
  }
  func.func @transform_7(%arg0: i32) -> (i32, i32) {
    %c0_i32 = arith.constant 0 : i32
    %c0_i32_0 = arith.constant 0 : i32
    return %arg0, %c0_i32 : i32, i32
  }
}

</mosaic_0001>

<llo_original>
// kernel: fully_connected_forward.1
$region0: #{fully_connected_forward.1}
  #allocation0 [shape = 'u32[]', space=smem, size = 0x4, offset = 0x4, fixed_abs, tag = 'smem constant byte address 0x4 - core index']
  #allocation1 [shape = 'u32[144,128]{1,0:T(1,128)}', space=vmem, size = 0x12000, scoped, tag = 'internal scratch']
  %s0 = inlined_call_operand.vmem [shape: bf16[8,32], index: 0, kind: input, shape index: {}]
  %s1 = inlined_call_operand.vmem [shape: bf16[32,128], index: 1, kind: input, shape index: {}]
  %s2 = inlined_call_operand.vmem [shape: f32[1,128], index: 2, kind: input, shape index: {}]
  %s3 = inlined_call_operand.vmem [shape: bf16[128,128], index: 3, kind: input, shape index: {}]
  %s4 = inlined_call_operand.vmem [shape: f32[1,128], index: 4, kind: input, shape index: {}]
  %s5 = inlined_call_operand.vmem [shape: bf16[128,16], index: 5, kind: input, shape index: {}]
  %s6 = inlined_call_operand.vmem [shape: f32[1,16], index: 6, kind: input, shape index: {}]
  %s7 = inlined_call_operand.hbm [shape: f32[8,16], index: 7, kind: output, shape index: {}]
  %s8 = sld [smem:[#allocation0]]
  $region38: #{fully_connected_forward.1} parent=0
    _
  %s10 = ssub.s32 1, %s8
  %s11 = scalar_select 0, %s10, %s8
  $region1: #{fully_connected_forward.1} parent=0
    #allocation2 [shape = 'u8[4096]{0}', space=vmem, size = 0x1000, scoped, tag = 'output window, operand 0, single buffered']
    #allocation3 [shape = 's32[1]{0}', space=sflag, size = 0x4, scoped, tag = 'scoped memory for fully_connected_forward.1']
    %12 = vsyncpa [#allocation3], 0
    // Predicated region
    $region2: #{fully_connected_forward.1} parent=1 // pred_check
      _
    $region3: #{fully_connected_forward.1} parent=1 // pred_check_branch
      %14 = sbr.rel (0) target = $region5
    $region4: #{fully_connected_forward.1} parent=1 // pred_region
      _
    $region5: #{fully_connected_forward.1} parent=1 // pred_fallthru
      _
    // Predicated region
    $region6: #{fully_connected_forward.1} parent=1 // pred_check
      _
    $region7: #{fully_connected_forward.1} parent=1 // pred_check_branch
      %16 = sbr.rel (0) target = $region9
    $region8: #{fully_connected_forward.1} parent=1 // pred_region
      _
    $region9: #{fully_connected_forward.1} parent=1 // pred_fallthru
      _
    // Predicated region
    $region10: #{fully_connected_forward.1} parent=1 // pred_check
      _
    $region11: #{fully_connected_forward.1} parent=1 // pred_check_branch
      %18 = sbr.rel (0) target = $region13
    $region12: #{fully_connected_forward.1} parent=1 // pred_region
      _
    $region13: #{fully_connected_forward.1} parent=1 // pred_fallthru
      _
    // Predicated region
    $region14: #{fully_connected_forward.1} parent=1 // pred_check
      _
    $region15: #{fully_connected_forward.1} parent=1 // pred_check_branch
      %20 = sbr.rel (0) target = $region17
    $region16: #{fully_connected_forward.1} parent=1 // pred_region
      _
    $region17: #{fully_connected_forward.1} parent=1 // pred_fallthru
      _
    // Predicated region
    $region18: #{fully_connected_forward.1} parent=1 // pred_check
      _
    $region19: #{fully_connected_forward.1} parent=1 // pred_check_branch
      %22 = sbr.rel (0) target = $region21
    $region20: #{fully_connected_forward.1} parent=1 // pred_region
      _
    $region21: #{fully_connected_forward.1} parent=1 // pred_fallthru
      _
    // Predicated region
    $region22: #{fully_connected_forward.1} parent=1 // pred_check
      _
    $region23: #{fully_connected_forward.1} parent=1 // pred_check_branch
      %24 = sbr.rel (0) target = $region25
    $region24: #{fully_connected_forward.1} parent=1 // pred_region
      _
    $region25: #{fully_connected_forward.1} parent=1 // pred_fallthru
      _
    // Predicated region
    $region26: #{fully_connected_forward.1} parent=1 // pred_check
      _
    $region27: #{fully_connected_forward.1} parent=1 // pred_check_branch
      %26 = sbr.rel (0) target = $region29
    $region28: #{fully_connected_forward.1} parent=1 // pred_region
      _
    $region29: #{fully_connected_forward.1} parent=1 // pred_fallthru
      _
    %v28 = vld [vmem:[%s0] sm:$0xf]
    %v29 = vld [vmem:[%s1] sm:$0xf]
    %v30 = vld [vmem:[%s1 + $0x4] sm:$0xf]
    %v31 = vld [vmem:[%s1 + $0x8] sm:$0xf]
    %v32 = vld [vmem:[%s1 + $0xc] sm:$0xf]
    %v33 = vld [vmem:[%s2] sm:$0x1]
    %v35 = vlaneseq
    %v36 = vshrl.u32 %v35, 7
    %v37 = vsub.s32 0, %v36
    %v38 = vrot.slane %v33, %v37
    %v44 = vunpack.c.l.b16 %v29
    %v45 = vunpack.c.l.b16 %v30
    %v46 = vunpack.c.l.b16 %v31
    %v47 = vunpack.c.l.b16 %v32
    %v48 = vpack.c.b16 %v45, %v44
    %v49 = vpack.c.b16 %v47, %v46
    %vm52 = vcmask 261120
    %v54 = vsel %vm52, %v28, 0
    %56 = vmatprep.subr.bf16.mxu0 0
    %57 = vmatpush1.bf16.msra.mxu0 0
    %58 = vmatprep.subr.bf16.mxu0 0
    %59 = vmatpush1.bf16.msra.mxu0 0
    %60 = vmatprep.subr.bf16.mxu0 0
    %61 = vmatpush1.bf16.msra.mxu0 0
    %62 = vmatprep.subr.bf16.mxu0 0
    %63 = vmatpush1.bf16.msra.mxu0 0
    %64 = vmatprep.subr.bf16.mxu0 0
    %65 = vmatpush1.bf16.msra.mxu0 0
    %66 = vmatprep.subr.bf16.mxu0 0
    %67 = vmatpush1.bf16.msra.mxu0 0
    %68 = vmatprep.subr.bf16.mxu0 0
    %69 = vmatpush1.bf16.msra.mxu0 %v49
    %70 = vmatprep.subr.bf16.mxu0 0
    %71 = vmatpush1.bf16.msra.mxu0 %v48
    %72 = vmatprep.subr.bf16.mxu0 0
    %73 = vmatpush2.bf16.msra.mxu0 0
    %74 = vmatprep.subr.bf16.mxu0 0
    %75 = vmatpush2.bf16.msra.mxu0 0
    %76 = vmatprep.subr.bf16.mxu0 0
    %77 = vmatpush2.bf16.msra.mxu0 0
    %78 = vmatprep.subr.bf16.mxu0 0
    %79 = vmatpush2.bf16.msra.mxu0 0
    %80 = vmatprep.subr.bf16.mxu0 0
    %81 = vmatpush2.bf16.msra.mxu0 0
    %82 = vmatprep.subr.bf16.mxu0 0
    %83 = vmatpush2.bf16.msra.mxu0 0
    %84 = vmatprep.subr.bf16.mxu0 0
    %85 = vmatpush2.bf16.msra.mxu0 0
    %86 = vmatprep.subr.bf16.mxu0 0
    %87 = vmatpush2.bf16.msra.mxu0 0
    %88 = vmatprep.mubr.bf16.mxu0 0
    %89 = vmatmul.mubr.bf16.gmra.mxu0 %v54
    %v90 = vpop.f32.mrf.mxu0
    %v91 = vadd.f32 %v38, %v90
    %v92 = vpop.f32.mrf.mxu0
    %v93 = vpop.f32.mrf.mxu0
    %v94 = vpop.f32.mrf.mxu0
    %95 = vdwg.mxu0
    %v96 = vmax.f32 %v91, 0.0
    %v97 = vpack.c.bf16 %v96, %v96
    %v98 = vld [vmem:[%s3] sm:$0xf]
    %v99 = vld [vmem:[%s3 + $0x4] sm:$0xf]
    %v100 = vld [vmem:[%s3 + $0x8] sm:$0xf]
    %v101 = vld [vmem:[%s3 + $0xc] sm:$0xf]
    %v102 = vld [vmem:[%s3 + $0x10] sm:$0xf]
    %v103 = vld [vmem:[%s3 + $0x14] sm:$0xf]
    %v104 = vld [vmem:[%s3 + $0x18] sm:$0xf]
    %v105 = vld [vmem:[%s3 + $0x1c] sm:$0xf]
    %v106 = vld [vmem:[%s3 + $0x20] sm:$0xf]
    %v107 = vld [vmem:[%s3 + $0x24] sm:$0xf]
    %v108 = vld [vmem:[%s3 + $0x28] sm:$0xf]
    %v109 = vld [vmem:[%s3 + $0x2c] sm:$0xf]
    %v110 = vld [vmem:[%s3 + $0x30] sm:$0xf]
    %v111 = vld [vmem:[%s3 + $0x34] sm:$0xf]
    %v112 = vld [vmem:[%s3 + $0x38] sm:$0xf]
    %v113 = vld [vmem:[%s3 + $0x3c] sm:$0xf]
    %v114 = vld [vmem:[%s4] sm:$0x1]
    %v116 = vlaneseq
    %v117 = vshrl.u32 %v116, 7
    %v118 = vsub.s32 0, %v117
    %v119 = vrot.slane %v114, %v118
    %v137 = vunpack.c.l.b16 %v98
    %v138 = vunpack.c.l.b16 %v99
    %v139 = vunpack.c.l.b16 %v100
    %v140 = vunpack.c.l.b16 %v101
    %v141 = vunpack.c.l.b16 %v102
    %v142 = vunpack.c.l.b16 %v103
    %v143 = vunpack.c.l.b16 %v104
    %v144 = vunpack.c.l.b16 %v105
    %v145 = vunpack.c.l.b16 %v106
    %v146 = vunpack.c.l.b16 %v107
    %v147 = vunpack.c.l.b16 %v108
    %v148 = vunpack.c.l.b16 %v109
    %v149 = vunpack.c.l.b16 %v110
    %v150 = vunpack.c.l.b16 %v111
    %v151 = vunpack.c.l.b16 %v112
    %v152 = vunpack.c.l.b16 %v113
    %v153 = vpack.c.b16 %v138, %v137
    %v154 = vpack.c.b16 %v140, %v139
    %v155 = vpack.c.b16 %v142, %v141
    %v156 = vpack.c.b16 %v144, %v143
    %v157 = vpack.c.b16 %v146, %v145
    %v158 = vpack.c.b16 %v148, %v147
    %v159 = vpack.c.b16 %v150, %v149
    %v160 = vpack.c.b16 %v152, %v151
    %169 = vmatprep.subr.bf16.mxu0 0
    %170 = vmatpush1.bf16.msra.mxu0 %v160
    %171 = vmatprep.subr.bf16.mxu0 0
    %172 = vmatpush1.bf16.msra.mxu0 %v159
    %173 = vmatprep.subr.bf16.mxu0 0
    %174 = vmatpush1.bf16.msra.mxu0 %v158
    %175 = vmatprep.subr.bf16.mxu0 0
    %176 = vmatpush1.bf16.msra.mxu0 %v157
    %177 = vmatprep.subr.bf16.mxu0 0
    %178 = vmatpush1.bf16.msra.mxu0 %v156
    %179 = vmatprep.subr.bf16.mxu0 0
    %180 = vmatpush1.bf16.msra.mxu0 %v155
    %181 = vmatprep.subr.bf16.mxu0 0
    %182 = vmatpush1.bf16.msra.mxu0 %v154
    %183 = vmatprep.subr.bf16.mxu0 0
    %184 = vmatpush1.bf16.msra.mxu0 %v153
    %185 = vmatprep.subr.bf16.mxu0 0
    %186 = vmatpush2.bf16.msra.mxu0 0
    %187 = vmatprep.subr.bf16.mxu0 0
    %188 = vmatpush2.bf16.msra.mxu0 0
    %189 = vmatprep.subr.bf16.mxu0 0
    %190 = vmatpush2.bf16.msra.mxu0 0
    %191 = vmatprep.subr.bf16.mxu0 0
    %192 = vmatpush2.bf16.msra.mxu0 0
    %193 = vmatprep.subr.bf16.mxu0 0
    %194 = vmatpush2.bf16.msra.mxu0 0
    %195 = vmatprep.subr.bf16.mxu0 0
    %196 = vmatpush2.bf16.msra.mxu0 0
    %197 = vmatprep.subr.bf16.mxu0 0
    %198 = vmatpush2.bf16.msra.mxu0 0
    %199 = vmatprep.subr.bf16.mxu0 0
    %200 = vmatpush2.bf16.msra.mxu0 0
    %201 = vmatprep.mubr.bf16.mxu0 0
    %202 = vmatmul.mubr.bf16.gmra.mxu0 %v97
    %v203 = vpop.f32.mrf.mxu0
    %v204 = vadd.f32 %v119, %v203
    %v205 = vpop.f32.mrf.mxu0
    %v206 = vpop.f32.mrf.mxu0
    %v207 = vpop.f32.mrf.mxu0
    %208 = vdwg.mxu0
    %v209 = vmax.f32 %v204, 0.0
    %v210 = vpack.c.bf16 %v209, %v209
    %v211 = vld [vmem:[%s5] sm:$0xf]
    %v212 = vld [vmem:[%s5 + $0x4] sm:$0xf]
    %v213 = vld [vmem:[%s5 + $0x8] sm:$0xf]
    %v214 = vld [vmem:[%s5 + $0xc] sm:$0xf]
    %v215 = vld [vmem:[%s5 + $0x10] sm:$0xf]
    %v216 = vld [vmem:[%s5 + $0x14] sm:$0xf]
    %v217 = vld [vmem:[%s5 + $0x18] sm:$0xf]
    %v218 = vld [vmem:[%s5 + $0x1c] sm:$0xf]
    %v219 = vld [vmem:[%s5 + $0x20] sm:$0xf]
    %v220 = vld [vmem:[%s5 + $0x24] sm:$0xf]
    %v221 = vld [vmem:[%s5 + $0x28] sm:$0xf]
    %v222 = vld [vmem:[%s5 + $0x2c] sm:$0xf]
    %v223 = vld [vmem:[%s5 + $0x30] sm:$0xf]
    %v224 = vld [vmem:[%s5 + $0x34] sm:$0xf]
    %v225 = vld [vmem:[%s5 + $0x38] sm:$0xf]
    %v226 = vld [vmem:[%s5 + $0x3c] sm:$0xf]
    %v227 = vld [vmem:[%s6] sm:$0x1]
    %v229 = vlaneseq
    %v230 = vshrl.u32 %v229, 7
    %v231 = vsub.s32 0, %v230
    %v232 = vrot.slane %v227, %v231
    %v250 = vunpack.c.l.b16 %v211
    %v251 = vunpack.c.l.b16 %v212
    %v252 = vunpack.c.l.b16 %v213
    %v253 = vunpack.c.l.b16 %v214
    %v254 = vunpack.c.l.b16 %v215
    %v255 = vunpack.c.l.b16 %v216
    %v256 = vunpack.c.l.b16 %v217
    %v257 = vunpack.c.l.b16 %v218
    %v258 = vunpack.c.l.b16 %v219
    %v259 = vunpack.c.l.b16 %v220
    %v260 = vunpack.c.l.b16 %v221
    %v261 = vunpack.c.l.b16 %v222
    %v262 = vunpack.c.l.b16 %v223
    %v263 = vunpack.c.l.b16 %v224
    %v264 = vunpack.c.l.b16 %v225
    %v265 = vunpack.c.l.b16 %v226
    %v266 = vpack.c.b16 %v251, %v250
    %v267 = vpack.c.b16 %v253, %v252
    %v268 = vpack.c.b16 %v255, %v254
    %v269 = vpack.c.b16 %v257, %v256
    %v270 = vpack.c.b16 %v259, %v258
    %v271 = vpack.c.b16 %v261, %v260
    %v272 = vpack.c.b16 %v263, %v262
    %v273 = vpack.c.b16 %v265, %v264
    %282 = vmatprep.subr.bf16.mxu0 0
    %283 = vmatpush1.bf16.msra.mxu0 %v273
    %284 = vmatprep.subr.bf16.mxu0 0
    %285 = vmatpush1.bf16.msra.mxu0 %v272
    %286 = vmatprep.subr.bf16.mxu0 0
    %287 = vmatpush1.bf16.msra.mxu0 %v271
    %288 = vmatprep.subr.bf16.mxu0 0
    %289 = vmatpush1.bf16.msra.mxu0 %v270
    %290 = vmatprep.subr.bf16.mxu0 0
    %291 = vmatpush1.bf16.msra.mxu0 %v269
    %292 = vmatprep.subr.bf16.mxu0 0
    %293 = vmatpush1.bf16.msra.mxu0 %v268
    %294 = vmatprep.subr.bf16.mxu0 0
    %295 = vmatpush1.bf16.msra.mxu0 %v267
    %296 = vmatprep.subr.bf16.mxu0 0
    %297 = vmatpush1.bf16.msra.mxu0 %v266
    %298 = vmatprep.subr.bf16.mxu0 0
    %299 = vmatpush2.bf16.msra.mxu0 0
    %300 = vmatprep.subr.bf16.mxu0 0
    %301 = vmatpush2.bf16.msra.mxu0 0
    %302 = vmatprep.subr.bf16.mxu0 0
    %303 = vmatpush2.bf16.msra.mxu0 0
    %304 = vmatprep.subr.bf16.mxu0 0
    %305 = vmatpush2.bf16.msra.mxu0 0
    %306 = vmatprep.subr.bf16.mxu0 0
    %307 = vmatpush2.bf16.msra.mxu0 0
    %308 = vmatprep.subr.bf16.mxu0 0
    %309 = vmatpush2.bf16.msra.mxu0 0
    %310 = vmatprep.subr.bf16.mxu0 0
    %311 = vmatpush2.bf16.msra.mxu0 0
    %312 = vmatprep.subr.bf16.mxu0 0
    %313 = vmatpush2.bf16.msra.mxu0 0
    %314 = vmatprep.mubr.bf16.mxu0 0
    %315 = vmatmul.mubr.bf16.gmra.mxu0 %v210
    %v316 = vpop.f32.mrf.mxu0
    %v317 = vadd.f32 %v232, %v316
    %v318 = vpop.f32.mrf.mxu0
    %v319 = vpop.f32.mrf.mxu0
    %v320 = vpop.f32.mrf.mxu0
    %321 = vdwg.mxu0
    %vm322 = vcmask 130048
    %323 = vst.msk [vmem:[#allocation2] sm:$0xff] %vm322, %v317
    // Predicated region
    $region30: #{fully_connected_forward.1} parent=1 // pred_check
      _
    $region31: #{fully_connected_forward.1} parent=1 // pred_check_branch
      %325 = sbr.rel (0) target = $region33
    $region32: #{fully_connected_forward.1} parent=1 // pred_region
      %s327 = ssub.s32 128, 128
      %328 = vsyncadd [#allocation3], %s327
      %s330 = sshll.u32 [#allocation2], 4
      %s331 = int_to_ptr.vmem [resolvable:$true] %s330
      %333 = dma.vmem_to_hbm [thread:$0]  %s331, 128, %s7, [#allocation3]
    $region33: #{fully_connected_forward.1} parent=1 // pred_fallthru
      _
    // Predicated region
    $region34: #{fully_connected_forward.1} parent=1 // pred_check
      _
    $region35: #{fully_connected_forward.1} parent=1 // pred_check_branch
      %335 = sbr.rel (0) target = $region37
    $region36: #{fully_connected_forward.1} parent=1 // pred_region
      %336 = dma.done [#allocation3], 128
    $region37: #{fully_connected_forward.1} parent=1 // pred_fallthru
      _
    %337 = vsyncpa [#allocation3], 1

</llo_original>
